<compile_context>
chip_gen: v7x
topology: tpu7x:2x2x1
jax: 0.10.0
libtpu: 0.0.40
codegen_flags: <defaults>
</compile_context>

<pallas_src>
import jax
import jax.numpy as jnp
from jax.experimental import pallas as pl
from jax.experimental.pallas import tpu as pltpu

L = 14              # Conv1d(k=3, stride=1, padding=1) keeps length 14; MaxPool(2,2) -> 7
L_PAD = L + 2       # 1-row zero halo each side -> 16 sublanes (tile aligned)
C_OUT = 2
POOL = 7
PR = 2 * POOL - 1   # 13 pooling rows per channel (pooled value j lives at row 2j)
FC1 = 4
NCLS = 2

# Lane (batch) tile.  ~1K lanes sits on the measured ~85% HBM-roofline plateau for this
# block size, keeps every (14-26, TB) f32 intermediate resident in vregs (no spills of
# the conv/pool chain), and leaves the grid with multiple steps for pipelining/megacore.
TB_MAX = 1024


def smallcnn_kernel(xp_ref, cw_ref, cb_ref, w1s_ref, b1_ref, dw_ref, db_ref, out_ref):
    # xp_ref: (16, TB) f32.  Row r holds x[r-1] (batch on lanes); rows 0 and 15 are the
    # Conv1d(padding=1) zero halo.  Padded batch lanes are zeros -> finite garbage only.
    xp = xp_ref[...]
    x0 = xp[0:L, :]          # x[l-1] for conv output position l
    x1 = xp[1:L + 1, :]      # x[l]
    x2 = xp[2:L + 2, :]      # x[l+1]

    pooled = []
    for o in range(C_OUT):
        # Conv1d channel o (row l = output position l) + ReLU; full-lane VPU ops with
        # scalar weight broadcasts from SMEM.
        c = cw_ref[o, 0] * x0 + cw_ref[o, 1] * x1 + cw_ref[o, 2] * x2 + cb_ref[o]
        c = jnp.maximum(c, 0.0)                                    # (14, TB)
        # MaxPool1d(k=2, s=2) as a pairwise max of two shifted views: pooled value j
        # sits at (even) row 2j.  Odd rows are garbage and are ONLY harmless because
        # the matching columns of w1s are exactly zero (see wrapper) - do not reorder.
        pooled.append(jnp.maximum(c[0:PR, :], c[1:PR + 1, :]))     # (13, TB)

    # Both channels feed a single wide-N fc1 matmul (one MXU dot instead of two).
    feats = jnp.concatenate(pooled, axis=0)                        # (26, TB)
    h = jnp.dot(w1s_ref[...], feats, preferred_element_type=jnp.float32) + b1_ref[...]
    h = jnp.maximum(h, 0.0)                                        # (4, TB)

    # fc2 + softmax over 2 classes == sigmoid of the logit difference d = l1 - l0.
    d = jnp.dot(dw_ref[...], h, preferred_element_type=jnp.float32) + db_ref[...]  # (1, TB)
    e = jnp.exp(-d)                      # EUP slot
    p1 = 1.0 / (1.0 + e)
    p0 = e * p1                          # = exp(-d)/(1+exp(-d)); avoids 1-p1 cancellation
    out_ref[...] = jnp.concatenate([p0, p1], axis=0)               # (2, TB), lane-dense


def _choose_tile(B, tb_max):
    """Pick lane tile TB (multiple of 128, <= tb_max) favouring >=4 grid steps."""
    bp128 = max(128, ((B + 127) // 128) * 128)
    tb = max(128, min(tb_max, (bp128 // 4) // 128 * 128))
    bp = max(tb, ((B + tb - 1) // tb) * tb)
    return tb, bp


def smallcnn_forward(x, params, tb_max=TB_MAX):
    """x: (B, 1, 14) float32 (NCL).  Returns (B, 2) softmax probabilities."""
    cw, cb, w1, b1, w2, b2 = params
    B = x.shape[0]
    TB, Bp = _choose_tile(B, tb_max)

    # Layout plumbing (one fused XLA transpose+pad under jit): batch -> lanes,
    # positions -> sublanes, 1-row zero halo so conv taps are static sublane slices.
    xs = x[:, 0, :].astype(jnp.float32)                # (B, 14)
    xp = jnp.pad(xs.T, ((1, 1), (0, Bp - B)))          # (16, Bp); padded lanes are zeros

    # Zero-expanded, channel-stacked fc1 weights for ONE fused dot:
    #   column 2j      <- w1[:, j]      (channel 0, pooled value j, kernel row 2j)
    #   column PR + 2j <- w1[:, 7 + j]  (channel 1, pooled value j, kernel row 13+2j)
    # Every other column is exactly zero; this is what neutralises the garbage odd
    # rows of the in-kernel pooling slab.
    w1s = jnp.zeros((FC1, 2 * PR), jnp.float32)
    w1s = w1s.at[:, 0:2 * POOL:2].set(w1[:, 0:POOL])
    w1s = w1s.at[:, PR:PR + 2 * POOL:2].set(w1[:, POOL:2 * POOL])
    b1c = b1.reshape(FC1, 1)

    # fc2 + 2-class softmax collapse: only the logit difference matters.
    dw = (w2[1] - w2[0]).reshape(1, FC1)
    db = (b2[1] - b2[0]).reshape(1, 1)

    out = pl.pallas_call(
        smallcnn_kernel,
        out_shape=jax.ShapeDtypeStruct((NCLS, Bp), jnp.float32),
        grid=(Bp // TB,),
        in_specs=[
            pl.BlockSpec((L_PAD, TB), lambda i: (0, i)),            # x slab (pipelined)
            pl.BlockSpec(memory_space=pltpu.MemorySpace.SMEM),      # conv weight (2, 3)
            pl.BlockSpec(memory_space=pltpu.MemorySpace.SMEM),      # conv bias (2,)
            pl.BlockSpec((FC1, 2 * PR), lambda i: (0, 0)),          # fused fc1 weight (4, 26)
            pl.BlockSpec((FC1, 1), lambda i: (0, 0)),               # fc1 bias (4, 1)
            pl.BlockSpec((1, FC1), lambda i: (0, 0)),               # fc2 weight diff (1, 4)
            pl.BlockSpec((1, 1), lambda i: (0, 0)),                 # fc2 bias diff (1, 1)
        ],
        out_specs=pl.BlockSpec((NCLS, TB), lambda i: (0, i)),
        compiler_params=pltpu.CompilerParams(
            dimension_semantics=("parallel",),   # batch tiles shard across TCs (v7x megacore)
        ),
    )(xp, cw, cb, w1s, b1c, dw, db)

    return out[:, :B].T                                # (B, 2)


def init_params(key):
    """Deterministic init; shapes match the PyTorch module (uniform +-1/sqrt(fan_in))."""
    ks = jax.random.split(key, 6)

    def u(k, shape, fan_in):
        bound = 1.0 / jnp.sqrt(fan_in)
        return jax.random.uniform(k, shape, jnp.float32, -bound, bound)

    cw = u(ks[0], (C_OUT, 3), 1 * 3)      # conv1.weight (out=2, in=1, k=3), in-dim squeezed
    cb = u(ks[1], (C_OUT,), 1 * 3)        # conv1.bias
    w1 = u(ks[2], (FC1, 2 * POOL), 14)    # fc1.weight
    b1 = u(ks[3], (FC1,), 14)             # fc1.bias
    w2 = u(ks[4], (NCLS, FC1), 4)         # fc2.weight
    b2 = u(ks[5], (NCLS,), 4)             # fc2.bias
    return cw, cb, w1, b1, w2, b2


def smallcnn_reference(x, params):
    cw, cb, w1, b1, w2, b2 = params
    xs = x[:, 0, :]
    xpad = jnp.pad(xs, ((0, 0), (1, 1)))
    conv = jnp.stack(
        [cw[o, 0] * xpad[:, 0:L] + cw[o, 1] * xpad[:, 1:L + 1]
         + cw[o, 2] * xpad[:, 2:L + 2] + cb[o] for o in range(C_OUT)], axis=1)  # (B, 2, 14)
    conv = jnp.maximum(conv, 0.0)
    pooled = jnp.max(conv.reshape(-1, C_OUT, POOL, 2), axis=-1)                 # (B, 2, 7)
    feat = pooled.reshape(-1, C_OUT * POOL)                                     # (B, 14)
    h = jnp.maximum(feat @ w1.T + b1, 0.0)
    logits = h @ w2.T + b2
    return jax.nn.softmax(logits, axis=1)


if __name__ == "__main__":
    key = jax.random.PRNGKey(0)
    kx, kp = jax.random.split(key)
    params = init_params(kp)
    fwd = jax.jit(smallcnn_forward)

    # Primary small-shape run (batch=2, NCL), grid of 1 tile.
    x = jax.random.normal(kx, (2, 1, L), jnp.float32)
    out = jax.block_until_ready(fwd(x, params))
    ref = smallcnn_reference(x, params)
    assert out.shape == (2, NCLS)
    assert jnp.allclose(out, ref, atol=1e-5, rtol=1e-5)

    # Batch-padding path + a 2-step grid (pipelining / megacore sharding exercised).
    x2 = jax.random.normal(kx, (130, 1, L), jnp.float32)
    out2 = jax.block_until_ready(fwd(x2, params))
    ref2 = smallcnn_reference(x2, params)
    assert out2.shape == (130, NCLS)
    assert jnp.allclose(out2, ref2, atol=1e-5, rtol=1e-5)

    # Larger batch: TB < Bp with >=4 grid steps.
    x3 = jax.random.normal(kx, (1030, 1, L), jnp.float32)
    out3 = jax.block_until_ready(fwd(x3, params))
    ref3 = smallcnn_reference(x3, params)
    assert out3.shape == (1030, NCLS)
    assert jnp.allclose(out3, ref3, atol=1e-5, rtol=1e-5)

    print("KERNEL_OK")
</pallas_src>

<mosaic_0001>
module attributes {stable_mosaic.version = 11 : i64} {
  func.func @smallcnn_kernel(%arg0: i32, %arg1: memref<16x128xf32, #tpu.memory_space<vmem>>, %arg2: memref<2x3xf32, #tpu.memory_space<smem>>, %arg3: memref<2xf32, #tpu.memory_space<smem>>, %arg4: memref<4x26xf32, #tpu.memory_space<vmem>>, %arg5: memref<4x1xf32, #tpu.memory_space<vmem>>, %arg6: memref<1x4xf32, #tpu.memory_space<vmem>>, %arg7: memref<1x1xf32, #tpu.memory_space<vmem>>, %arg8: memref<2x128xf32, #tpu.memory_space<vmem>>) attributes {dimension_semantics = [#tpu.dimension_semantics<parallel>], iteration_bounds = array<i64: 1>, scalar_prefetch = 0 : i64, scratch_operands = 0 : i64, tpu.core_type = #tpu.core_type<tc>, window_params = [{transform_indices = @transform_0, window_bounds = array<i64: 16, 128>}, {transform_indices = @transform_1, window_bounds = array<i64: 2, 3>}, {transform_indices = @transform_2, window_bounds = array<i64: 2>}, {pipeline_mode = #tpu.pipeline_mode<synchronous>, transform_indices = @transform_3, window_bounds = array<i64: 4, 26>}, {pipeline_mode = #tpu.pipeline_mode<synchronous>, transform_indices = @transform_4, window_bounds = array<i64: 4, 1>}, {pipeline_mode = #tpu.pipeline_mode<synchronous>, transform_indices = @transform_5, window_bounds = array<i64: 1, 4>}, {pipeline_mode = #tpu.pipeline_mode<synchronous>, transform_indices = @transform_6, window_bounds = array<i64: 1, 1>}, {transform_indices = @transform_7, window_bounds = array<i64: 2, 128>}]} {
    %c0 = arith.constant 0 : index
    %c0_0 = arith.constant 0 : index
    %0 = vector.load %arg1[%c0, %c0_0] : memref<16x128xf32, #tpu.memory_space<vmem>>, vector<16x128xf32>
    %1 = vector.extract_strided_slice %0 {offsets = [0, 0], sizes = [14, 128], strides = [1, 1]} : vector<16x128xf32> to vector<14x128xf32>
    %2 = vector.extract_strided_slice %0 {offsets = [1, 0], sizes = [14, 128], strides = [1, 1]} : vector<16x128xf32> to vector<14x128xf32>
    %3 = vector.extract_strided_slice %0 {offsets = [2, 0], sizes = [14, 128], strides = [1, 1]} : vector<16x128xf32> to vector<14x128xf32>
    %c0_1 = arith.constant 0 : index
    %c0_2 = arith.constant 0 : index
    %4 = memref.load %arg2[%c0_1, %c0_2] : memref<2x3xf32, #tpu.memory_space<smem>>
    %5 = vector.broadcast %4 : f32 to vector<14x128xf32>
    %6 = arith.mulf %5, %1 : vector<14x128xf32>
    %c0_3 = arith.constant 0 : index
    %c1 = arith.constant 1 : index
    %7 = memref.load %arg2[%c0_3, %c1] : memref<2x3xf32, #tpu.memory_space<smem>>
    %8 = vector.broadcast %7 : f32 to vector<14x128xf32>
    %9 = arith.mulf %8, %2 : vector<14x128xf32>
    %10 = arith.addf %6, %9 : vector<14x128xf32>
    %c0_4 = arith.constant 0 : index
    %c2 = arith.constant 2 : index
    %11 = memref.load %arg2[%c0_4, %c2] : memref<2x3xf32, #tpu.memory_space<smem>>
    %12 = vector.broadcast %11 : f32 to vector<14x128xf32>
    %13 = arith.mulf %12, %3 : vector<14x128xf32>
    %14 = arith.addf %10, %13 : vector<14x128xf32>
    %c0_5 = arith.constant 0 : index
    %15 = memref.load %arg3[%c0_5] : memref<2xf32, #tpu.memory_space<smem>>
    %16 = vector.broadcast %15 : f32 to vector<14x128xf32>
    %17 = arith.addf %14, %16 : vector<14x128xf32>
    %cst = arith.constant 0.000000e+00 : f32
    %18 = vector.broadcast %cst : f32 to vector<14x128xf32>
    %19 = arith.maximumf %17, %18 : vector<14x128xf32>
    %20 = vector.extract_strided_slice %19 {offsets = [0, 0], sizes = [13, 128], strides = [1, 1]} : vector<14x128xf32> to vector<13x128xf32>
    %21 = vector.extract_strided_slice %19 {offsets = [1, 0], sizes = [13, 128], strides = [1, 1]} : vector<14x128xf32> to vector<13x128xf32>
    %22 = arith.maximumf %20, %21 : vector<13x128xf32>
    %c1_6 = arith.constant 1 : index
    %c0_7 = arith.constant 0 : index
    %23 = memref.load %arg2[%c1_6, %c0_7] : memref<2x3xf32, #tpu.memory_space<smem>>
    %24 = vector.broadcast %23 : f32 to vector<14x128xf32>
    %25 = arith.mulf %24, %1 : vector<14x128xf32>
    %c1_8 = arith.constant 1 : index
    %c1_9 = arith.constant 1 : index
    %26 = memref.load %arg2[%c1_8, %c1_9] : memref<2x3xf32, #tpu.memory_space<smem>>
    %27 = vector.broadcast %26 : f32 to vector<14x128xf32>
    %28 = arith.mulf %27, %2 : vector<14x128xf32>
    %29 = arith.addf %25, %28 : vector<14x128xf32>
    %c1_10 = arith.constant 1 : index
    %c2_11 = arith.constant 2 : index
    %30 = memref.load %arg2[%c1_10, %c2_11] : memref<2x3xf32, #tpu.memory_space<smem>>
    %31 = vector.broadcast %30 : f32 to vector<14x128xf32>
    %32 = arith.mulf %31, %3 : vector<14x128xf32>
    %33 = arith.addf %29, %32 : vector<14x128xf32>
    %c1_12 = arith.constant 1 : index
    %34 = memref.load %arg3[%c1_12] : memref<2xf32, #tpu.memory_space<smem>>
    %35 = vector.broadcast %34 : f32 to vector<14x128xf32>
    %36 = arith.addf %33, %35 : vector<14x128xf32>
    %cst_13 = arith.constant 0.000000e+00 : f32
    %37 = vector.broadcast %cst_13 : f32 to vector<14x128xf32>
    %38 = arith.maximumf %36, %37 : vector<14x128xf32>
    %39 = vector.extract_strided_slice %38 {offsets = [0, 0], sizes = [13, 128], strides = [1, 1]} : vector<14x128xf32> to vector<13x128xf32>
    %40 = vector.extract_strided_slice %38 {offsets = [1, 0], sizes = [13, 128], strides = [1, 1]} : vector<14x128xf32> to vector<13x128xf32>
    %41 = arith.maximumf %39, %40 : vector<13x128xf32>
    %42 = tpu.concatenate %22, %41 in 0 : vector<13x128xf32>, vector<13x128xf32> -> vector<26x128xf32>
    %c0_14 = arith.constant 0 : index
    %c0_15 = arith.constant 0 : index
    %43 = vector.load %arg4[%c0_14, %c0_15] : memref<4x26xf32, #tpu.memory_space<vmem>>, vector<4x26xf32>
    %cst_16 = arith.constant dense<0.000000e+00> : vector<4x128xf32>
    %44 = tpu.matmul %43, %42, %cst_16 {dimension_numbers = #tpu.dot_dimension_numbers<[1], [0], [0], [1], [0, 0, 1, 1], [], []>} : vector<4x26xf32>, vector<26x128xf32>, vector<4x128xf32> -> vector<4x128xf32>
    %c0_17 = arith.constant 0 : index
    %c0_18 = arith.constant 0 : index
    %45 = vector.load %arg5[%c0_17, %c0_18] : memref<4x1xf32, #tpu.memory_space<vmem>>, vector<4x1xf32>
    %46 = vector.broadcast %45 : vector<4x1xf32> to vector<4x128xf32>
    %47 = arith.addf %44, %46 : vector<4x128xf32>
    %cst_19 = arith.constant 0.000000e+00 : f32
    %48 = vector.broadcast %cst_19 : f32 to vector<4x128xf32>
    %49 = arith.maximumf %47, %48 : vector<4x128xf32>
    %c0_20 = arith.constant 0 : index
    %c0_21 = arith.constant 0 : index
    %50 = vector.load %arg6[%c0_20, %c0_21] : memref<1x4xf32, #tpu.memory_space<vmem>>, vector<1x4xf32>
    %cst_22 = arith.constant dense<0.000000e+00> : vector<1x128xf32>
    %51 = tpu.matmul %50, %49, %cst_22 {dimension_numbers = #tpu.dot_dimension_numbers<[1], [0], [0], [1], [0, 0, 1, 1], [], []>} : vector<1x4xf32>, vector<4x128xf32>, vector<1x128xf32> -> vector<1x128xf32>
    %c0_23 = arith.constant 0 : index
    %c0_24 = arith.constant 0 : index
    %52 = vector.load %arg7[%c0_23, %c0_24] : memref<1x1xf32, #tpu.memory_space<vmem>>, vector<1x1xf32>
    %53 = vector.broadcast %52 : vector<1x1xf32> to vector<1x128xf32>
    %54 = arith.addf %51, %53 : vector<1x128xf32>
    %cst_25 = arith.constant 0.000000e+00 : f32
    %55 = vector.broadcast %cst_25 : f32 to vector<1x128xf32>
    %56 = arith.subf %55, %54 : vector<1x128xf32>
    %57 = math.exp %56 : vector<1x128xf32>
    %cst_26 = arith.constant 1.000000e+00 : f32
    %58 = vector.broadcast %cst_26 : f32 to vector<1x128xf32>
    %59 = arith.addf %58, %57 : vector<1x128xf32>
    %cst_27 = arith.constant 1.000000e+00 : f32
    %60 = vector.broadcast %cst_27 : f32 to vector<1x128xf32>
    %61 = arith.divf %60, %59 : vector<1x128xf32>
    %62 = arith.mulf %57, %61 : vector<1x128xf32>
    %63 = tpu.concatenate %62, %61 in 0 : vector<1x128xf32>, vector<1x128xf32> -> vector<2x128xf32>
    %c0_28 = arith.constant 0 : index
    %c0_29 = arith.constant 0 : index
    %64 = vector.load %arg8[%c0_28, %c0_29] : memref<2x128xf32, #tpu.memory_space<vmem>>, vector<2x128xf32>
    tpu.vector_store %arg8[%c0_28, %c0_29], %63 {strides = array<i32>} : memref<2x128xf32, #tpu.memory_space<vmem>>, vector<2x128xf32>,
    return
  }
  func.func @transform_0(%arg0: i32) -> (i32, i32) {
    %c0_i32 = arith.constant 0 : i32
    %c0_i32_0 = arith.constant 0 : i32
    return %c0_i32, %arg0 : i32, i32
  }
  func.func @transform_1(%arg0: i32) -> (i32, i32) {
    %c0_i32 = arith.constant 0 : i32
    %c0_i32_0 = arith.constant 0 : i32
    %c0_i32_1 = arith.constant 0 : i32
    return %c0_i32, %c0_i32_0 : i32, i32
  }
  func.func @transform_2(%arg0: i32) -> i32 {
    %c0_i32 = arith.constant 0 : i32
    %c0_i32_0 = arith.constant 0 : i32
    return %c0_i32 : i32
  }
  func.func @transform_3(%arg0: i32) -> (i32, i32) {
    %c0_i32 = arith.constant 0 : i32
    %c0_i32_0 = arith.constant 0 : i32
    %c0_i32_1 = arith.constant 0 : i32
    return %c0_i32, %c0_i32_0 : i32, i32
  }
  func.func @transform_4(%arg0: i32) -> (i32, i32) {
    %c0_i32 = arith.constant 0 : i32
    %c0_i32_0 = arith.constant 0 : i32
    %c0_i32_1 = arith.constant 0 : i32
    return %c0_i32, %c0_i32_0 : i32, i32
  }
  func.func @transform_5(%arg0: i32) -> (i32, i32) {
    %c0_i32 = arith.constant 0 : i32
    %c0_i32_0 = arith.constant 0 : i32
    %c0_i32_1 = arith.constant 0 : i32
    return %c0_i32, %c0_i32_0 : i32, i32
  }
  func.func @transform_6(%arg0: i32) -> (i32, i32) {
    %c0_i32 = arith.constant 0 : i32
    %c0_i32_0 = arith.constant 0 : i32
    %c0_i32_1 = arith.constant 0 : i32
    return %c0_i32, %c0_i32_0 : i32, i32
  }
  func.func @transform_7(%arg0: i32) -> (i32, i32) {
    %c0_i32 = arith.constant 0 : i32
    %c0_i32_0 = arith.constant 0 : i32
    return %c0_i32, %arg0 : i32, i32
  }
}

</mosaic_0001>

<llo_original>
// kernel: smallcnn_forward.1
$region0: #{smallcnn_forward.1}
  #allocation0 [shape = 'u32[]', space=smem, size = 0x4, offset = 0x4, fixed_abs, tag = 'smem constant byte address 0x4 - core index']
  #allocation1 [shape = 'u32[144,128]{1,0:T(1,128)}', space=vmem, size = 0x12000, scoped, tag = 'internal scratch']
  #allocation2 [shape = 'f32[1,1]{1,0:T(1,128)S(1)}', space=vmem, size = 0x200, scoped, tag = 'scoped memory for smallcnn_forward.1']
  %s0 = inlined_call_operand.vmem [shape: f32[16,128], index: 0, kind: input, shape index: {}]
  %s1 = inlined_call_operand.vmem [shape: f32[2,3], index: 1, kind: input, shape index: {}]
  %s2 = inlined_call_operand.vmem [shape: f32[2], index: 2, kind: input, shape index: {}]
  %s3 = inlined_call_operand.vmem [shape: f32[4,26], index: 3, kind: input, shape index: {}]
  %s4 = inlined_call_operand.vmem [shape: f32[4,1], index: 4, kind: input, shape index: {}]
  %s5 = inlined_call_operand.vmem [shape: f32[1,4], index: 5, kind: input, shape index: {}]
  %s6 = inlined_call_operand.<no memory space> [shape: f32[1,1], index: 6, kind: input, shape index: {}]
  %s7 = inlined_call_operand.vmem [shape: f32[2,128], index: 7, kind: output, shape index: {}]
  %s8 = sld [smem:[#allocation0]]
  $region46: #{smallcnn_forward.1} parent=0
    _
  %s10 = ssub.s32 1, %s8
  %s11 = scalar_select 0, %s10, %s8
  %v12 = vstv %s6
  %13 = vst [vmem:[#allocation2] sm:$0x1] %v12
  $region1: #{smallcnn_forward.1} parent=0
    #allocation3 [shape = 'u8[1024]{0}', space=smem, size = 0x400, scoped, tag = 'input window, operand 1, single buffered']
    #allocation4 [shape = 's32[1]{0}', space=sflag, size = 0x4, scoped, tag = 'scoped memory for smallcnn_forward.1']
    #allocation5 [shape = 'u8[512]{0}', space=smem, size = 0x200, scoped, tag = 'input window, operand 2, single buffered']
    #allocation6 [shape = 's32[1]{0}', space=sflag, size = 0x4, scoped, tag = 'scoped memory for smallcnn_forward.1']
    %14 = vsyncpa [#allocation4], 0
    %15 = vsyncpa [#allocation6], 0
    // Predicated region
    $region2: #{smallcnn_forward.1} parent=1 // pred_check
      _
    $region3: #{smallcnn_forward.1} parent=1 // pred_check_branch
      %17 = sbr.rel (0) target = $region5
    $region4: #{smallcnn_forward.1} parent=1 // pred_region
      _
    $region5: #{smallcnn_forward.1} parent=1 // pred_fallthru
      _
    // Predicated region
    $region6: #{smallcnn_forward.1} parent=1 // pred_check
      _
    $region7: #{smallcnn_forward.1} parent=1 // pred_check_branch
      %19 = sbr.rel (0) target = $region9
    $region8: #{smallcnn_forward.1} parent=1 // pred_region
      %s21 = ssub.s32 32, 32
      %22 = vsyncadd [#allocation4], %s21
      %s24 = sshll.u32 %s1, 4
      %s25 = int_to_ptr.vmem [resolvable:$true] %s24
      %27 = dma.vmem_to_smem %s25, 32, [#allocation3], [#allocation4]
    $region9: #{smallcnn_forward.1} parent=1 // pred_fallthru
      _
    // Predicated region
    $region10: #{smallcnn_forward.1} parent=1 // pred_check
      _
    $region11: #{smallcnn_forward.1} parent=1 // pred_check_branch
      %29 = sbr.rel (0) target = $region13
    $region12: #{smallcnn_forward.1} parent=1 // pred_region
      %s31 = ssub.s32 16, 16
      %32 = vsyncadd [#allocation6], %s31
      %s34 = sshll.u32 %s2, 4
      %s35 = int_to_ptr.vmem [resolvable:$true] %s34
      %37 = dma.vmem_to_smem %s35, 16, [#allocation5], [#allocation6]
    $region13: #{smallcnn_forward.1} parent=1 // pred_fallthru
      _
    // Predicated region
    $region14: #{smallcnn_forward.1} parent=1 // pred_check
      _
    $region15: #{smallcnn_forward.1} parent=1 // pred_check_branch
      %39 = sbr.rel (0) target = $region17
    $region16: #{smallcnn_forward.1} parent=1 // pred_region
      _
    $region17: #{smallcnn_forward.1} parent=1 // pred_fallthru
      _
    // Predicated region
    $region18: #{smallcnn_forward.1} parent=1 // pred_check
      _
    $region19: #{smallcnn_forward.1} parent=1 // pred_check_branch
      %41 = sbr.rel (0) target = $region21
    $region20: #{smallcnn_forward.1} parent=1 // pred_region
      _
    $region21: #{smallcnn_forward.1} parent=1 // pred_fallthru
      _
    // Predicated region
    $region22: #{smallcnn_forward.1} parent=1 // pred_check
      _
    $region23: #{smallcnn_forward.1} parent=1 // pred_check_branch
      %43 = sbr.rel (0) target = $region25
    $region24: #{smallcnn_forward.1} parent=1 // pred_region
      _
    $region25: #{smallcnn_forward.1} parent=1 // pred_fallthru
      _
    // Predicated region
    $region26: #{smallcnn_forward.1} parent=1 // pred_check
      _
    $region27: #{smallcnn_forward.1} parent=1 // pred_check_branch
      %45 = sbr.rel (0) target = $region29
    $region28: #{smallcnn_forward.1} parent=1 // pred_region
      _
    $region29: #{smallcnn_forward.1} parent=1 // pred_fallthru
      _
    // Predicated region
    $region30: #{smallcnn_forward.1} parent=1 // pred_check
      _
    $region31: #{smallcnn_forward.1} parent=1 // pred_check_branch
      %47 = sbr.rel (0) target = $region33
    $region32: #{smallcnn_forward.1} parent=1 // pred_region
      %48 = dma.done [#allocation4], 32
    $region33: #{smallcnn_forward.1} parent=1 // pred_fallthru
      _
    // Predicated region
    $region34: #{smallcnn_forward.1} parent=1 // pred_check
      _
    $region35: #{smallcnn_forward.1} parent=1 // pred_check_branch
      %50 = sbr.rel (0) target = $region37
    $region36: #{smallcnn_forward.1} parent=1 // pred_region
      %51 = dma.done [#allocation6], 16
    $region37: #{smallcnn_forward.1} parent=1 // pred_fallthru
      _
    %52 = sfence
    %v53 = vld [vmem:[%s0] sm:$0xff]
    %v54 = vld [vmem:[%s0 + $0x8] sm:$0xff]
    %s55 = sld [smem:[#allocation3]]
    %v56 = vstv %s55
    %v57 = vmul.f32 %v56, %v53
    %v58 = vmul.f32 %v56, %v54
    %s59 = sld [smem:[#allocation3 + $0x1]]
    %v60 = vstv %s59
    %v61 = vmul.f32 %v60, %v53
    %v62 = vmul.f32 %v60, %v54
    %vm65 = vcmask 1046528
    %v66 = vrot.slane %v61, 1
    %v67 = vrot.slane %v62, 1
    %v68 = vsel %vm65, %v66, %v67
    %v71 = vadd.f32 %v57, %v68
    %v72 = vadd.f32 %v58, %v67
    %s73 = sld [smem:[#allocation3 + $0x2]]
    %v74 = vstv %s73
    %v75 = vmul.f32 %v74, %v53
    %v76 = vmul.f32 %v74, %v54
    %vm79 = vcmask 1045504
    %v80 = vrot.slane %v75, 2
    %v81 = vrot.slane %v76, 2
    %v82 = vsel %vm79, %v80, %v81
    %v85 = vadd.f32 %v71, %v82
    %v86 = vadd.f32 %v72, %v81
    %s87 = sld [smem:[#allocation5]]
    %v88 = vstv %s87
    %v89 = vadd.f32 %v85, %v88
    %v90 = vadd.f32 %v86, %v88
    %v91 = vmax.f32 %v89, 0.0
    %v92 = vmax.f32 %v90, 0.0
    %v95 = vrot.slane %v91, 1
    %v96 = vrot.slane %v92, 1
    %v97 = vsel %vm65, %v95, %v96
    %v100 = vmax.f32 %v91, %v97
    %v101 = vmax.f32 %v92, %v96
    %s102 = sld [smem:[#allocation3 + $0x80]]
    %v103 = vstv %s102
    %v104 = vmul.f32 %v103, %v53
    %v105 = vmul.f32 %v103, %v54
    %s106 = sld [smem:[#allocation3 + $0x81]]
    %v107 = vstv %s106
    %v108 = vmul.f32 %v107, %v53
    %v109 = vmul.f32 %v107, %v54
    %v112 = vrot.slane %v108, 1
    %v113 = vrot.slane %v109, 1
    %v114 = vsel %vm65, %v112, %v113
    %v117 = vadd.f32 %v104, %v114
    %v118 = vadd.f32 %v105, %v113
    %s119 = sld [smem:[#allocation3 + $0x82]]
    %v120 = vstv %s119
    %v121 = vmul.f32 %v120, %v53
    %v122 = vmul.f32 %v120, %v54
    %v125 = vrot.slane %v121, 2
    %v126 = vrot.slane %v122, 2
    %v127 = vsel %vm79, %v125, %v126
    %v130 = vadd.f32 %v117, %v127
    %v131 = vadd.f32 %v118, %v126
    %s132 = sld [smem:[#allocation5 + $0x1]]
    %v133 = vstv %s132
    %v134 = vadd.f32 %v130, %v133
    %v135 = vadd.f32 %v131, %v133
    %v136 = vmax.f32 %v134, 0.0
    %v137 = vmax.f32 %v135, 0.0
    %v140 = vrot.slane %v136, 1
    %v141 = vrot.slane %v137, 1
    %v142 = vsel %vm65, %v140, %v141
    %v145 = vmax.f32 %v136, %v142
    %v146 = vmax.f32 %v137, %v141
    %vm149 = vcmask 1044480
    %v150 = vrot.slane %v145, 3
    %v151 = vrot.slane %v146, 3
    %v152 = vsel %vm149, %v150, %v151
    %v155 = vsel %vm149, %v101, %v150
    %v156 = vld [vmem:[%s3] sm:$0xf]
    %v157 = vld [vmem:[%s4] sm:$0xf]
    %159 = vset.pattern.permute.xlu0 0
    %160 = vperm.xlu0 %159, %v157
    %v161 = vpop.permute.xlu0 %160
    %vm163 = vcmask 211968
    %v165 = vsel %vm163, %v156, 0
    %vm167 = vcmask 1041408
    %v168 = vsel %vm167, %v151, 0
    %170 = vmatprep.subr.mxu0 0.0
    %171 = vmatpush1.msra.mxu0 %v100
    %172 = vmatprep.subr.mxu0 0.0
    %173 = vmatpush1.msra.mxu0 %v155
    %174 = vmatprep.subr.mxu0 0.0
    %175 = vmatpush1.msra.mxu0 %v152
    %176 = vmatprep.subr.mxu0 0.0
    %177 = vmatpush1.msra.mxu0 %v168
    %178 = vmatprep.subr.mxu0 0.0
    %179 = vmatpush1.msra.mxu0 0.0
    %180 = vmatprep.subr.mxu0 0.0
    %181 = vmatpush1.msra.mxu0 0.0
    %182 = vmatprep.subr.mxu0 0.0
    %183 = vmatpush1.msra.mxu0 0.0
    %184 = vmatprep.subr.mxu0 0.0
    %185 = vmatpush1.msra.mxu0 0.0
    %186 = vmatprep.subr.mxu0 0.0
    %187 = vmatpush1.msra.mxu0 0.0
    %188 = vmatprep.subr.mxu0 0.0
    %189 = vmatpush1.msra.mxu0 0.0
    %190 = vmatprep.subr.mxu0 0.0
    %191 = vmatpush1.msra.mxu0 0.0
    %192 = vmatprep.subr.mxu0 0.0
    %193 = vmatpush1.msra.mxu0 0.0
    %194 = vmatprep.subr.mxu0 0.0
    %195 = vmatpush1.msra.mxu0 0.0
    %196 = vmatprep.subr.mxu0 0.0
    %197 = vmatpush1.msra.mxu0 0.0
    %198 = vmatprep.subr.mxu0 0.0
    %199 = vmatpush1.msra.mxu0 0.0
    %200 = vmatprep.subr.mxu0 0.0
    %201 = vmatpush1.msra.mxu0 0.0
    %202 = vmatprep.subr.mxu0 0.0
    %203 = vmatpush1.msra.mxu0 0.0
    %204 = vmatprep.subr.mxu0 0.0
    %205 = vmatpush1.msra.mxu0 0.0
    %206 = vmatprep.subr.mxu0 0.0
    %207 = vmatpush1.msra.mxu0 0.0
    %208 = vmatprep.subr.mxu0 0.0
    %209 = vmatpush1.msra.mxu0 0.0
    %210 = vmatprep.subr.mxu0 0.0
    %211 = vmatpush1.msra.mxu0 0.0
    %212 = vmatprep.subr.mxu0 0.0
    %213 = vmatpush1.msra.mxu0 0.0
    %214 = vmatprep.subr.mxu0 0.0
    %215 = vmatpush1.msra.mxu0 0.0
    %216 = vmatprep.subr.mxu0 0.0
    %217 = vmatpush1.msra.mxu0 0.0
    %218 = vmatprep.subr.mxu0 0.0
    %219 = vmatpush1.msra.mxu0 0.0
    %220 = vmatprep.subr.mxu0 0.0
    %221 = vmatpush1.msra.mxu0 0.0
    %222 = vmatprep.subr.mxu0 0.0
    %223 = vmatpush1.msra.mxu0 0.0
    %224 = vmatprep.subr.mxu0 0.0
    %225 = vmatpush1.msra.mxu0 0.0
    %226 = vmatprep.subr.mxu0 0.0
    %227 = vmatpush1.msra.mxu0 0.0
    %228 = vmatprep.subr.mxu0 0.0
    %229 = vmatpush1.msra.mxu0 0.0
    %230 = vmatprep.subr.mxu0 0.0
    %231 = vmatpush1.msra.mxu0 0.0
    %232 = vmatprep.subr.mxu0 0.0
    %233 = vmatpush1.msra.mxu0 0.0
    %234 = vmatprep.mubr.f32.mxu0 0.0
    %235 = vmatmul.mubr.f32.gmra.mrb[0].mxu0 %v165
    %v236 = vpop.f32.mrb[0].mxu0
    %v237 = vadd.f32 %v161, %v236
    %v238 = vpop.f32.mrb[0].mxu0
    %239 = vdwg.mxu0
    %v240 = vmax.f32 %v237, 0.0
    %v241 = vld [vmem:[%s5] sm:$0x1]
    %v242 = vld [vmem:[#allocation2] sm:$0x1]
    %244 = vset.pattern.permute.xlu0 0
    %245 = vperm.xlu0 %244, %v242
    %v246 = vpop.permute.xlu0 %245
    %v248 = vlaneseq
    %v249 = vshrl.u32 %v248, 7
    %v250 = vsub.s32 0, %v249
    %v251 = vrot.slane %v246, %v250
    %vm252 = vcmask 31744
    %v254 = vsel %vm252, %v241, 0
    %vm256 = vcmask 1043456
    %v258 = vsel %vm256, %v240, 0
    %260 = vmatprep.subr.mxu0 0.0
    %261 = vmatpush1.msra.mxu0 %v258
    %262 = vmatprep.subr.mxu0 0.0
    %263 = vmatpush1.msra.mxu0 0.0
    %264 = vmatprep.subr.mxu0 0.0
    %265 = vmatpush1.msra.mxu0 0.0
    %266 = vmatprep.subr.mxu0 0.0
    %267 = vmatpush1.msra.mxu0 0.0
    %268 = vmatprep.subr.mxu0 0.0
    %269 = vmatpush1.msra.mxu0 0.0
    %270 = vmatprep.subr.mxu0 0.0
    %271 = vmatpush1.msra.mxu0 0.0
    %272 = vmatprep.subr.mxu0 0.0
    %273 = vmatpush1.msra.mxu0 0.0
    %274 = vmatprep.subr.mxu0 0.0
    %275 = vmatpush1.msra.mxu0 0.0
    %276 = vmatprep.subr.mxu0 0.0
    %277 = vmatpush1.msra.mxu0 0.0
    %278 = vmatprep.subr.mxu0 0.0
    %279 = vmatpush1.msra.mxu0 0.0
    %280 = vmatprep.subr.mxu0 0.0
    %281 = vmatpush1.msra.mxu0 0.0
    %282 = vmatprep.subr.mxu0 0.0
    %283 = vmatpush1.msra.mxu0 0.0
    %284 = vmatprep.subr.mxu0 0.0
    %285 = vmatpush1.msra.mxu0 0.0
    %286 = vmatprep.subr.mxu0 0.0
    %287 = vmatpush1.msra.mxu0 0.0
    %288 = vmatprep.subr.mxu0 0.0
    %289 = vmatpush1.msra.mxu0 0.0
    %290 = vmatprep.subr.mxu0 0.0
    %291 = vmatpush1.msra.mxu0 0.0
    %292 = vmatprep.subr.mxu0 0.0
    %293 = vmatpush1.msra.mxu0 0.0
    %294 = vmatprep.subr.mxu0 0.0
    %295 = vmatpush1.msra.mxu0 0.0
    %296 = vmatprep.subr.mxu0 0.0
    %297 = vmatpush1.msra.mxu0 0.0
    %298 = vmatprep.subr.mxu0 0.0
    %299 = vmatpush1.msra.mxu0 0.0
    %300 = vmatprep.subr.mxu0 0.0
    %301 = vmatpush1.msra.mxu0 0.0
    %302 = vmatprep.subr.mxu0 0.0
    %303 = vmatpush1.msra.mxu0 0.0
    %304 = vmatprep.subr.mxu0 0.0
    %305 = vmatpush1.msra.mxu0 0.0
    %306 = vmatprep.subr.mxu0 0.0
    %307 = vmatpush1.msra.mxu0 0.0
    %308 = vmatprep.subr.mxu0 0.0
    %309 = vmatpush1.msra.mxu0 0.0
    %310 = vmatprep.subr.mxu0 0.0
    %311 = vmatpush1.msra.mxu0 0.0
    %312 = vmatprep.subr.mxu0 0.0
    %313 = vmatpush1.msra.mxu0 0.0
    %314 = vmatprep.subr.mxu0 0.0
    %315 = vmatpush1.msra.mxu0 0.0
    %316 = vmatprep.subr.mxu0 0.0
    %317 = vmatpush1.msra.mxu0 0.0
    %318 = vmatprep.subr.mxu0 0.0
    %319 = vmatpush1.msra.mxu0 0.0
    %320 = vmatprep.subr.mxu0 0.0
    %321 = vmatpush1.msra.mxu0 0.0
    %322 = vmatprep.subr.mxu0 0.0
    %323 = vmatpush1.msra.mxu0 0.0
    %324 = vmatprep.mubr.f32.mxu0 0.0
    %325 = vmatmul.mubr.f32.gmra.mrb[0].mxu0 %v254
    %v326 = vpop.f32.mrb[0].mxu0
    %v327 = vadd.f32 %v251, %v326
    %v328 = vpop.f32.mrb[0].mxu0
    %329 = vdwg.mxu0
    %v330 = vsub.f32 0.0, %v327
    %v331 = vmul.f32 %v330, 1.442695
    %v332 = vpow.pop %v331
    %v333 = vadd.f32 %v332, 1.0
    %v334 = vrcp.pop %v333
    %v335 = vmul.f32 1.0, %v334
    %v336 = vmul.f32 %v332, %v335
    %v338 = vrot.slane %v335, 7
    %vm340 = vcmask 1040384
    %v341 = vsel %vm340, %v336, %v338
    %342 = vst [vmem:[%s7] sm:$0x3] %v341
    // Predicated region
    $region38: #{smallcnn_forward.1} parent=1 // pred_check
      _
    $region39: #{smallcnn_forward.1} parent=1 // pred_check_branch
      %344 = sbr.rel (0) target = $region41
    $region40: #{smallcnn_forward.1} parent=1 // pred_region
      _
    $region41: #{smallcnn_forward.1} parent=1 // pred_fallthru
      _
    // Predicated region
    $region42: #{smallcnn_forward.1} parent=1 // pred_check
      _
    $region43: #{smallcnn_forward.1} parent=1 // pred_check_branch
      %346 = sbr.rel (0) target = $region45
    $region44: #{smallcnn_forward.1} parent=1 // pred_region
      _
    $region45: #{smallcnn_forward.1} parent=1 // pred_fallthru
      _
    %347 = vsyncpa [#allocation4], 1
    %348 = vsyncpa [#allocation6], 1

</llo_original>
